<compile_context>
chip_gen: v5e
topology: v5e:2x2
jax: 0.10.0
libtpu: 0.0.40
codegen_flags: <defaults>
</compile_context>

<pallas_src>
import jax
import jax.numpy as jnp
from jax.experimental import pallas as pl
from jax.experimental.pallas import tpu as pltpu

EPS = 1e-5


def _cbn_kernel(x_ref, gamma_ref, beta_ref, o_ref):
    # x_ref:     (N, c_tile, HW)  float32
    # gamma_ref: (N, c_tile, 1)   float32
    # beta_ref:  (N, c_tile, 1)   float32
    x = x_ref[...]
    n, _, hw = x.shape
    inv_count = 1.0 / float(n * hw)

    # One-pass statistics: reduce the cheap leading (batch) axis first, then the lane axis.
    s0 = jnp.sum(x, axis=0)                         # (c_tile, HW)
    ss0 = jnp.sum(x * x, axis=0)                    # (c_tile, HW)
    s = jnp.sum(s0, axis=-1, keepdims=True)         # (c_tile, 1)
    ss = jnp.sum(ss0, axis=-1, keepdims=True)       # (c_tile, 1)

    mean = (s * inv_count)[None]                    # (1, c_tile, 1)
    var = (ss * inv_count)[None] - mean * mean      # (1, c_tile, 1)  E[x^2] - E[x]^2
    inv_std = jax.lax.rsqrt(var + EPS)              # (1, c_tile, 1)

    # Fold BN normalization and conditional affine into a single per-(n,c) scale/shift.
    scale = gamma_ref[...] * inv_std                # (N, c_tile, 1)
    shift = beta_ref[...] - scale * mean            # (N, c_tile, 1)
    o_ref[...] = (scale * x + shift).astype(o_ref.dtype)


def _pick_c_tile(N, C, HW, bytes_per_elem=4, vmem_budget_bytes=24 << 20):
    """Largest channel tile whose double-buffered in+out blocks fit the VMEM budget."""
    per_channel = 4 * N * HW * bytes_per_elem       # 2 bufs x (in block + out block)
    max_tile = max(1, vmem_budget_bytes // per_channel)
    if C <= max_tile:
        return C
    best = None
    for t in range(8, C, 8):                        # multiples of 8 keep (8,128) alignment
        if C % t == 0 and t <= max_tile:
            best = t
    if best is not None:
        return best
    for t in range(8, C + 1, 8):                    # fall back: smallest aligned divisor
        if C % t == 0:
            return t
    return C


def shared_conditional_batch_norm_2d(x, y, embedding_weight, *, c_tile=None):
    """x: (N, C, H, W), y: (N,) int32, embedding_weight: (num_classes, 2*C)."""
    N, C, H, W = x.shape
    HW = H * W

    # Embedding lookup (gather) stays in plain JAX glue.
    gb = jnp.take(embedding_weight, y, axis=0).astype(jnp.float32)   # (N, 2*C)
    gamma = gb[:, :C][:, :, None]                                    # (N, C, 1)
    beta = gb[:, C:][:, :, None]                                     # (N, C, 1)

    x3 = x.reshape(N, C, HW).astype(jnp.float32)

    if c_tile is None:
        c_tile = _pick_c_tile(N, C, HW)
    assert C % c_tile == 0, "channel tile must divide C"

    block_bytes = N * c_tile * HW * 4
    # 2 buffers x (in block + out block) + small gamma/beta/headroom.
    vmem_limit = int(min(100 << 20, max(8 << 20, 5 * block_bytes)))

    out3 = pl.pallas_call(
        _cbn_kernel,
        out_shape=jax.ShapeDtypeStruct((N, C, HW), jnp.float32),
        grid=(C // c_tile,),
        in_specs=[
            pl.BlockSpec((N, c_tile, HW), lambda c: (0, c, 0)),
            pl.BlockSpec((N, c_tile, 1), lambda c: (0, c, 0)),
            pl.BlockSpec((N, c_tile, 1), lambda c: (0, c, 0)),
        ],
        out_specs=pl.BlockSpec((N, c_tile, HW), lambda c: (0, c, 0)),
        compiler_params=pltpu.CompilerParams(
            dimension_semantics=("parallel",),
            vmem_limit_bytes=vmem_limit,
        ),
    )(x3, gamma, beta)

    return out3.reshape(N, C, H, W).astype(x.dtype)


def _reference(x, y, embedding_weight):
    N, C, H, W = x.shape
    mean = jnp.mean(x, axis=(0, 2, 3), keepdims=True)
    var = jnp.mean((x - mean) ** 2, axis=(0, 2, 3), keepdims=True)
    x_hat = (x - mean) / jnp.sqrt(var + EPS)
    gb = embedding_weight[y]
    gamma = gb[:, :C].reshape(N, C, 1, 1)
    beta = gb[:, C:].reshape(N, C, 1, 1)
    return gamma * x_hat + beta


if __name__ == "__main__":
    key = jax.random.PRNGKey(0)
    k_x, k_emb, k_y = jax.random.split(key, 3)

    N, C, H, W = 2, 4, 16, 16
    num_classes = 10

    x = jax.random.normal(k_x, (N, C, H, W), dtype=jnp.float32)
    # Deterministic embedding init: gamma part ~ 1 + noise, beta part ~ noise.
    emb_noise = 0.1 * jax.random.normal(k_emb, (num_classes, 2 * C), dtype=jnp.float32)
    embedding_weight = emb_noise.at[:, :C].add(1.0)
    y = jax.random.randint(k_y, (N,), 0, num_classes, dtype=jnp.int32)

    out = shared_conditional_batch_norm_2d(x, y, embedding_weight)
    out = jax.block_until_ready(out)

    ref = _reference(x, y, embedding_weight)
    assert out.shape == (N, C, H, W)
    assert jnp.allclose(out, ref, atol=1e-5, rtol=1e-5), "mismatch vs reference"

    print("KERNEL_OK")
</pallas_src>

<mosaic_0001>
module attributes {stable_mosaic.version = 11 : i64} {
  func.func @_cbn_kernel(%arg0: i32, %arg1: memref<2x4x256xf32, #tpu.memory_space<vmem>>, %arg2: memref<2x4x1xf32, #tpu.memory_space<vmem>>, %arg3: memref<2x4x1xf32, #tpu.memory_space<vmem>>, %arg4: memref<2x4x256xf32, #tpu.memory_space<vmem>>) attributes {dimension_semantics = [#tpu.dimension_semantics<parallel>], iteration_bounds = array<i64: 1>, scalar_prefetch = 0 : i64, scratch_operands = 0 : i64, tpu.core_type = #tpu.core_type<tc>, window_params = [{transform_indices = @transform_0, window_bounds = array<i64: 2, 4, 256>}, {transform_indices = @transform_1, window_bounds = array<i64: 2, 4, 1>}, {transform_indices = @transform_2, window_bounds = array<i64: 2, 4, 1>}, {transform_indices = @transform_3, window_bounds = array<i64: 2, 4, 256>}]} {
    %c0 = arith.constant 0 : index
    %c0_0 = arith.constant 0 : index
    %c0_1 = arith.constant 0 : index
    %0 = vector.load %arg1[%c0, %c0_0, %c0_1] : memref<2x4x256xf32, #tpu.memory_space<vmem>>, vector<2x4x256xf32>
    %cst = arith.constant dense<0.000000e+00> : vector<4x256xf32>
    %1 = vector.multi_reduction <add>, %0, %cst [0] : vector<2x4x256xf32> to vector<4x256xf32>
    %2 = arith.mulf %0, %0 : vector<2x4x256xf32>
    %cst_2 = arith.constant dense<0.000000e+00> : vector<4x256xf32>
    %3 = vector.multi_reduction <add>, %2, %cst_2 [0] : vector<2x4x256xf32> to vector<4x256xf32>
    %cst_3 = arith.constant dense<0.000000e+00> : vector<4xf32>
    %4 = vector.multi_reduction <add>, %1, %cst_3 [1] : vector<4x256xf32> to vector<4xf32>
    %5 = vector.shape_cast %4 : vector<4xf32> to vector<4x1xf32>
    %cst_4 = arith.constant dense<0.000000e+00> : vector<4xf32>
    %6 = vector.multi_reduction <add>, %3, %cst_4 [1] : vector<4x256xf32> to vector<4xf32>
    %7 = vector.shape_cast %6 : vector<4xf32> to vector<4x1xf32>
    %cst_5 = arith.constant 0.001953125 : f32
    %8 = vector.broadcast %cst_5 : f32 to vector<4x1xf32>
    %9 = arith.mulf %5, %8 : vector<4x1xf32>
    %10 = vector.shape_cast %9 : vector<4x1xf32> to vector<1x4x1xf32>
    %cst_6 = arith.constant 0.001953125 : f32
    %11 = vector.broadcast %cst_6 : f32 to vector<4x1xf32>
    %12 = arith.mulf %7, %11 : vector<4x1xf32>
    %13 = vector.shape_cast %12 : vector<4x1xf32> to vector<1x4x1xf32>
    %14 = arith.mulf %10, %10 : vector<1x4x1xf32>
    %15 = arith.subf %13, %14 : vector<1x4x1xf32>
    %cst_7 = arith.constant 9.99999974E-6 : f32
    %16 = vector.broadcast %cst_7 : f32 to vector<1x4x1xf32>
    %17 = arith.addf %15, %16 : vector<1x4x1xf32>
    %18 = math.rsqrt %17 : vector<1x4x1xf32>
    %c0_8 = arith.constant 0 : index
    %c0_9 = arith.constant 0 : index
    %c0_10 = arith.constant 0 : index
    %19 = vector.load %arg2[%c0_8, %c0_9, %c0_10] : memref<2x4x1xf32, #tpu.memory_space<vmem>>, vector<2x4x1xf32>
    %20 = vector.broadcast %18 : vector<1x4x1xf32> to vector<2x4x1xf32>
    %21 = arith.mulf %19, %20 : vector<2x4x1xf32>
    %c0_11 = arith.constant 0 : index
    %c0_12 = arith.constant 0 : index
    %c0_13 = arith.constant 0 : index
    %22 = vector.load %arg3[%c0_11, %c0_12, %c0_13] : memref<2x4x1xf32, #tpu.memory_space<vmem>>, vector<2x4x1xf32>
    %23 = vector.broadcast %10 : vector<1x4x1xf32> to vector<2x4x1xf32>
    %24 = arith.mulf %21, %23 : vector<2x4x1xf32>
    %25 = arith.subf %22, %24 : vector<2x4x1xf32>
    %26 = vector.broadcast %21 : vector<2x4x1xf32> to vector<2x4x256xf32>
    %27 = arith.mulf %26, %0 : vector<2x4x256xf32>
    %28 = vector.broadcast %25 : vector<2x4x1xf32> to vector<2x4x256xf32>
    %29 = arith.addf %27, %28 : vector<2x4x256xf32>
    %c0_14 = arith.constant 0 : index
    %c0_15 = arith.constant 0 : index
    %c0_16 = arith.constant 0 : index
    %30 = vector.load %arg4[%c0_14, %c0_15, %c0_16] : memref<2x4x256xf32, #tpu.memory_space<vmem>>, vector<2x4x256xf32>
    tpu.vector_store %arg4[%c0_14, %c0_15, %c0_16], %29 {strides = array<i32>} : memref<2x4x256xf32, #tpu.memory_space<vmem>>, vector<2x4x256xf32>,
    return
  }
  func.func @transform_0(%arg0: i32) -> (i32, i32, i32) {
    %c0_i32 = arith.constant 0 : i32
    %c0_i32_0 = arith.constant 0 : i32
    %c0_i32_1 = arith.constant 0 : i32
    return %c0_i32, %arg0, %c0_i32_0 : i32, i32, i32
  }
  func.func @transform_1(%arg0: i32) -> (i32, i32, i32) {
    %c0_i32 = arith.constant 0 : i32
    %c0_i32_0 = arith.constant 0 : i32
    %c0_i32_1 = arith.constant 0 : i32
    return %c0_i32, %arg0, %c0_i32_0 : i32, i32, i32
  }
  func.func @transform_2(%arg0: i32) -> (i32, i32, i32) {
    %c0_i32 = arith.constant 0 : i32
    %c0_i32_0 = arith.constant 0 : i32
    %c0_i32_1 = arith.constant 0 : i32
    return %c0_i32, %arg0, %c0_i32_0 : i32, i32, i32
  }
  func.func @transform_3(%arg0: i32) -> (i32, i32, i32) {
    %c0_i32 = arith.constant 0 : i32
    %c0_i32_0 = arith.constant 0 : i32
    %c0_i32_1 = arith.constant 0 : i32
    return %c0_i32, %arg0, %c0_i32_0 : i32, i32, i32
  }
}

</mosaic_0001>

<llo_original>
// kernel: tpu_custom_call.1
$region0: #{tpu_custom_call.1}
  #allocation0 [shape = 'u32[]', space=smem, size = 0x4, offset = 0x4, fixed_abs, tag = 'smem constant byte address 0x4 - core index']
  #allocation1 [shape = 'u32[72,128]{1,0:T(1,128)}', space=vmem, size = 0x9000, scoped, tag = 'internal scratch']
  %s0 = inlined_call_operand.vmem [shape: f32[2,4,256], index: 0, kind: input, shape index: {}]
  %s1 = inlined_call_operand.vmem [shape: f32[2,4,1], index: 1, kind: input, shape index: {}]
  %s2 = inlined_call_operand.vmem [shape: f32[2,4,1], index: 2, kind: input, shape index: {}]
  %s3 = inlined_call_operand.hbm [shape: f32[2,4,256], index: 3, kind: output, shape index: {}]
  %s4 = sld [smem:[#allocation0]]
  $region22: #{tpu_custom_call.1} parent=0
    _
  %s6 = ssub.s32 1, %s4
  %s7 = scalar_select 0, %s6, %s4
  $region1: #{tpu_custom_call.1} parent=0
    #allocation2 [shape = 'u8[8192]{0}', space=vmem, size = 0x2000, scoped, tag = 'output window, operand 0, single buffered']
    #allocation3 [shape = 's32[1]{0}', space=sflag, size = 0x4, scoped, tag = 'scoped memory for tpu_custom_call.1']
    %8 = vsyncpa [#allocation3], 0
    // Predicated region
    $region2: #{tpu_custom_call.1} parent=1 // pred_check
      _
    $region3: #{tpu_custom_call.1} parent=1 // pred_check_branch
      %10 = sbr.rel (0) target = $region5
    $region4: #{tpu_custom_call.1} parent=1 // pred_region
      _
    $region5: #{tpu_custom_call.1} parent=1 // pred_fallthru
      _
    // Predicated region
    $region6: #{tpu_custom_call.1} parent=1 // pred_check
      _
    $region7: #{tpu_custom_call.1} parent=1 // pred_check_branch
      %12 = sbr.rel (0) target = $region9
    $region8: #{tpu_custom_call.1} parent=1 // pred_region
      _
    $region9: #{tpu_custom_call.1} parent=1 // pred_fallthru
      _
    // Predicated region
    $region10: #{tpu_custom_call.1} parent=1 // pred_check
      _
    $region11: #{tpu_custom_call.1} parent=1 // pred_check_branch
      %14 = sbr.rel (0) target = $region13
    $region12: #{tpu_custom_call.1} parent=1 // pred_region
      _
    $region13: #{tpu_custom_call.1} parent=1 // pred_fallthru
      _
    %v15 = vld [vmem:[%s0] sm:$0xff]
    %v16 = vld [vmem:[%s0 + $0x8] sm:$0xff]
    %19 = vst [vmem:[#allocation1] ss:$2 sm:$0xff] %v15
    %v20 = vld.sshfl [vmem:[#allocation1] sm:$0xff pattern:$0x75316420]
    %v21 = vld.sshfl [vmem:[#allocation1 + $0x8] sm:$0xff pattern:$0x75316420]
    %s22 = scalar_lea.vmem [#allocation1], 16
    %23 = vst [vmem:[%s22] ss:$2 sm:$0xff] %v16
    %v24 = vld.sshfl [vmem:[#allocation1 + $0x10] sm:$0xff pattern:$0x75316420]
    %v25 = vld.sshfl [vmem:[#allocation1 + $0x18] sm:$0xff pattern:$0x75316420]
    %vm30 = vcmask 1043456
    %v31 = vsel %vm30, %v20, 0.0
    %v32 = vsel %vm30, %v24, 0.0
    %v33 = vadd.f32 %v31, %v32
    %v34 = vsel %vm30, %v21, 0.0
    %v35 = vsel %vm30, %v25, 0.0
    %v36 = vadd.f32 %v34, %v35
    %v37 = vmul.f32 %v15, %v15
    %v38 = vmul.f32 %v16, %v16
    %41 = vst [vmem:[#allocation1] ss:$2 sm:$0xff] %v37
    %v42 = vld.sshfl [vmem:[#allocation1] sm:$0xff pattern:$0x75316420]
    %v43 = vld.sshfl [vmem:[#allocation1 + $0x8] sm:$0xff pattern:$0x75316420]
    %s44 = scalar_lea.vmem [#allocation1], 16
    %45 = vst [vmem:[%s44] ss:$2 sm:$0xff] %v38
    %v46 = vld.sshfl [vmem:[#allocation1 + $0x10] sm:$0xff pattern:$0x75316420]
    %v47 = vld.sshfl [vmem:[#allocation1 + $0x18] sm:$0xff pattern:$0x75316420]
    %v52 = vsel %vm30, %v42, 0.0
    %v53 = vsel %vm30, %v46, 0.0
    %v54 = vadd.f32 %v52, %v53
    %v55 = vsel %vm30, %v43, 0.0
    %v56 = vsel %vm30, %v47, 0.0
    %v57 = vadd.f32 %v55, %v56
    %v58 = vsel %vm30, %v33, 0.0
    %v59 = vsel %vm30, %v36, 0.0
    %v60 = vadd.f32 %v58, %v59
    %61 = vadd.xlane.f32.xlu0 %v60
    %v62 = vpop.xlane.xlu0 %61
    %v63 = vsel %vm30, %v54, 0.0
    %v64 = vsel %vm30, %v57, 0.0
    %v65 = vadd.f32 %v63, %v64
    %66 = vadd.xlane.f32.xlu0 %v65
    %v67 = vpop.xlane.xlu0 %66
    %v68 = vmul.f32 %v62, 0.001953125
    %v69 = vmul.f32 %v67, 0.001953125
    %v70 = vmul.f32 %v68, %v68
    %v71 = vsub.f32 %v69, %v70
    %v72 = vadd.f32 %v71, 1e-05
    %v73 = vrsqrt.pop %v72
    %v74 = vmul.f32 %v73, %v72
    %v75 = vmul.f32 %v74, %v73
    %v76 = vmul.f32 0.5, %v75
    %v77 = vsub.f32 1.5, %v76
    %v78 = vmul.f32 %v73, %v77
    %vm79 = vweird.f32 %v72
    %vm80 = vweird.f32 %v73
    %vm81 = vmor %vm79, %vm80
    %v82 = vsel %vm81, %v73, %v78
    %v83 = vld [vmem:[%s1] sm:$0xf]
    %v84 = vld [vmem:[%s1 + $0x4] sm:$0xf]
    %v85 = vmul.f32 %v83, %v82
    %v86 = vmul.f32 %v84, %v82
    %v87 = vld [vmem:[%s2] sm:$0xf]
    %v88 = vld [vmem:[%s2 + $0x4] sm:$0xf]
    %v89 = vmul.f32 %v85, %v68
    %v90 = vmul.f32 %v86, %v68
    %v91 = vsub.f32 %v87, %v89
    %v92 = vsub.f32 %v88, %v90
    %94 = vset.pattern.permute.xlu0 0
    %95 = vperm.xlu0 %94, %v85
    %v96 = vpop.permute.xlu0 %95
    %99 = vset.pattern.permute.xlu0 0
    %100 = vperm.xlu0 %99, %v86
    %v101 = vpop.permute.xlu0 %100
    %103 = vst [vmem:[#allocation1] ss:$2 sm:$0xff] %v15
    %v104 = vld.sshfl [vmem:[#allocation1] sm:$0xff pattern:$0x75316420]
    %v105 = vld.sshfl [vmem:[#allocation1 + $0x8] sm:$0xff pattern:$0x75316420]
    %s106 = scalar_lea.vmem [#allocation1], 16
    %107 = vst [vmem:[%s106] ss:$2 sm:$0xff] %v16
    %v108 = vld.sshfl [vmem:[#allocation1 + $0x10] sm:$0xff pattern:$0x75316420]
    %v109 = vld.sshfl [vmem:[#allocation1 + $0x18] sm:$0xff pattern:$0x75316420]
    %v114 = vmul.f32 %v96, %v104
    %v115 = vmul.f32 %v96, %v105
    %v116 = vmul.f32 %v101, %v108
    %v117 = vmul.f32 %v101, %v109
    %119 = vset.pattern.permute.xlu0 0
    %120 = vperm.xlu0 %119, %v91
    %v121 = vpop.permute.xlu0 %120
    %124 = vset.pattern.permute.xlu0 0
    %125 = vperm.xlu0 %124, %v92
    %v126 = vpop.permute.xlu0 %125
    %v128 = vadd.f32 %v114, %v121
    %v129 = vadd.f32 %v115, %v121
    %v130 = vadd.f32 %v116, %v126
    %v131 = vadd.f32 %v117, %v126
    %v136 = vrot.slane %v129, 4
    %v137 = vrot.slane %v131, 4
    %v138 = vsel %vm30, %v128, %v136
    %v139 = vsel %vm30, %v130, %v137
    %142 = vst [vmem:[#allocation2] sm:$0xff] %v138
    %143 = vst [vmem:[#allocation2 + $0x8] sm:$0xff] %v139
    // Predicated region
    $region14: #{tpu_custom_call.1} parent=1 // pred_check
      _
    $region15: #{tpu_custom_call.1} parent=1 // pred_check_branch
      %145 = sbr.rel (0) target = $region17
    $region16: #{tpu_custom_call.1} parent=1 // pred_region
      %147 = vsyncadd [#allocation3], 0
      %s148 = sshll.u32 [#allocation2], 4
      %s149 = int_to_ptr.vmem [resolvable:$true] %s148
      %s150 = sshll.u32 %s3, 4
      %s151 = int_to_ptr.hbm [resolvable:$true] %s150
      %156 = dma.vmem_to_hbm [thread:$0]  %s149, 256, %s151, [#allocation3], 128, 128, 8
    $region17: #{tpu_custom_call.1} parent=1 // pred_fallthru
      _
    // Predicated region
    $region18: #{tpu_custom_call.1} parent=1 // pred_check
      _
    $region19: #{tpu_custom_call.1} parent=1 // pred_check_branch
      %158 = sbr.rel (0) target = $region21
    $region20: #{tpu_custom_call.1} parent=1 // pred_region
      %160 = dma.done [#allocation3], 256
    $region21: #{tpu_custom_call.1} parent=1 // pred_fallthru
      _
    %161 = vsyncpa [#allocation3], 1

</llo_original>
